<compile_context>
chip_gen: v5e
topology: v5e:2x2
jax: 0.10.0
libtpu: 0.0.40
codegen_flags: <defaults>
</compile_context>

<pallas_src>
import jax
import jax.numpy as jnp
from jax import lax
from jax.experimental import pallas as pl
from jax.experimental.pallas import tpu as pltpu


# ----------------------------- toy config ------------------------------------
BATCH = 2
NUM_CHANNELS = 4
IMAGE_SIZE = 16          # H == W
PATCH_SIZE = 8
HIDDEN_SIZE = 32

GRID_H = IMAGE_SIZE // PATCH_SIZE
GRID_W = IMAGE_SIZE // PATCH_SIZE
NUM_PATCHES = GRID_H * GRID_W                       # 4
PATCH_DIM = NUM_CHANNELS * PATCH_SIZE * PATCH_SIZE  # K = 256


# ----------------------------- Pallas kernel ---------------------------------
def patch_embed_kernel(x_ref, w_ref, b_ref, out_ref, patch_ref):
    """One (batch, patch-row) block.

    x_ref:     (C, P, gw, P)   NCHW sub-view of one row of patches
    w_ref:     (hidden, K)     conv weight, natural flatten order (c, ph, pw)
    b_ref:     (1, hidden)     conv bias
    out_ref:   (gw, hidden)    embeddings for this row of patches
    patch_ref: (gw, K)         VMEM scratch: im2col staging buffer
    """
    C, P, gw, _ = x_ref.shape

    # Fused im2col: each (c, ph) strip of pixels is a contiguous (gw, P) tile
    # in the input block; scatter it to its K-offset in the staging buffer.
    # All slices are static -> plain (masked) vector stores in VMEM, no
    # relayouts, no extra HBM traffic.
    for c in range(C):
        for ph in range(P):
            off = (c * P + ph) * P
            patch_ref[:, off:off + P] = x_ref[c, ph]

    # Single MXU GEMM per block, contracting K on the last dim of BOTH
    # operands (transposed RHS is native to the MXU -> no wrapper-side `.T`).
    y = lax.dot_general(
        patch_ref[...], w_ref[...],
        dimension_numbers=(((1,), (1,)), ((), ())),
        preferred_element_type=jnp.float32)
    y = y + b_ref[...].astype(jnp.float32)
    out_ref[...] = y.astype(out_ref.dtype)


# ----------------------------- wrapper ----------------------------------------
@jax.jit
def udop_patch_embeddings(pixel_values, conv_weight, conv_bias):
    """pixel_values: (B, C, H, W); conv_weight: (hidden, C, P, P); conv_bias: (hidden,).

    Returns embeddings of shape (B, num_patches, hidden), matching
    UdopPatchEmbeddings.forward (conv -> flatten(2) -> transpose(1, 2)).
    """
    B, C, H, W = pixel_values.shape
    hidden, _, ph, pw = conv_weight.shape
    if H != IMAGE_SIZE or W != IMAGE_SIZE:
        raise ValueError(
            f"Input image size ({H}*{W}) doesn't match model "
            f"({IMAGE_SIZE}*{IMAGE_SIZE}).")
    gh, gw = H // ph, W // pw
    n = gh * gw
    k = C * ph * pw

    # Free, metadata-only dim splits (no data movement):
    # (B, C, H, W) -> (B, C, gh, P, gw, P)
    xr = pixel_values.reshape(B, C, gh, ph, gw, pw)
    # Natural weight layout, flatten order (c, ph, pw): (hidden, K). NO transpose.
    w = conv_weight.reshape(hidden, k)
    b = conv_bias.reshape(1, hidden)

    flops = 2 * B * n * k * hidden
    bytes_accessed = (pixel_values.size * pixel_values.dtype.itemsize
                      + w.size * w.dtype.itemsize
                      + b.size * b.dtype.itemsize
                      + B * n * hidden * pixel_values.dtype.itemsize)

    out = pl.pallas_call(
        patch_embed_kernel,
        out_shape=jax.ShapeDtypeStruct((B, gh, gw, hidden), pixel_values.dtype),
        grid=(B, gh),
        in_specs=[
            # One (batch, patch-row) block; batch/row dims squeezed out.
            pl.BlockSpec((None, C, None, ph, gw, pw),
                         lambda bi, ri: (bi, 0, ri, 0, 0, 0)),
            # Weight / bias: same block every step -> DMA'd once, stay resident.
            pl.BlockSpec((hidden, k), lambda bi, ri: (0, 0)),
            pl.BlockSpec((1, hidden), lambda bi, ri: (0, 0)),
        ],
        out_specs=pl.BlockSpec((None, None, gw, hidden),
                               lambda bi, ri: (bi, ri, 0, 0)),
        scratch_shapes=[pltpu.VMEM((gw, k), pixel_values.dtype)],
        compiler_params=pltpu.CompilerParams(
            dimension_semantics=("parallel", "parallel")),
        cost_estimate=pl.CostEstimate(
            flops=flops, transcendentals=0, bytes_accessed=bytes_accessed),
    )(xr, w, b)

    # (B, gh, gw, hidden) -> (B, num_patches, hidden): free reshape.
    return out.reshape(B, n, hidden)


# --------------------------- pure-JAX reference -------------------------------
def reference(pixel_values, conv_weight, conv_bias):
    out = jax.lax.conv_general_dilated(
        pixel_values, conv_weight,
        window_strides=(PATCH_SIZE, PATCH_SIZE),
        padding="VALID",
        dimension_numbers=("NCHW", "OIHW", "NCHW"))
    out = out + conv_bias[None, :, None, None]
    B, hd, gh, gw = out.shape
    return out.reshape(B, hd, gh * gw).transpose(0, 2, 1)


# ----------------------------------- main --------------------------------------
if __name__ == "__main__":
    key = jax.random.PRNGKey(0)
    k_x, k_w, k_b = jax.random.split(key, 3)

    pixel_values = jax.random.normal(
        k_x, (BATCH, NUM_CHANNELS, IMAGE_SIZE, IMAGE_SIZE), jnp.float32)
    # nn.Conv2d(num_channels, hidden_size, kernel_size=patch, stride=patch)
    # weight: (hidden, C, P, P), bias: (hidden,)
    conv_weight = 0.02 * jax.random.normal(
        k_w, (HIDDEN_SIZE, NUM_CHANNELS, PATCH_SIZE, PATCH_SIZE), jnp.float32)
    conv_bias = 0.02 * jax.random.normal(k_b, (HIDDEN_SIZE,), jnp.float32)

    out = udop_patch_embeddings(pixel_values, conv_weight, conv_bias)
    out = jax.block_until_ready(out)

    ref = reference(pixel_values, conv_weight, conv_bias)
    assert out.shape == (BATCH, NUM_PATCHES, HIDDEN_SIZE)
    assert jnp.allclose(out, ref, atol=1e-4, rtol=1e-4), "mismatch vs reference"

    print("KERNEL_OK")
</pallas_src>

<mosaic_0001>
module attributes {stable_mosaic.version = 11 : i64} {
  func.func @patch_embed_kernel(%arg0: i32, %arg1: i32, %arg2: memref<1x4x1x8x2x8xf32, #tpu.memory_space<vmem>>, %arg3: memref<32x256xf32, #tpu.memory_space<vmem>>, %arg4: memref<1x32xf32, #tpu.memory_space<vmem>>, %arg5: memref<1x1x2x32xf32, #tpu.memory_space<vmem>>, %arg6: memref<2x256xf32, #tpu.memory_space<vmem>>) attributes {dimension_semantics = [#tpu.dimension_semantics<parallel>, #tpu.dimension_semantics<parallel>], iteration_bounds = array<i64: 2, 2>, scalar_prefetch = 0 : i64, scratch_operands = 1 : i64, tpu.core_type = #tpu.core_type<tc>, window_params = [{transform_indices = @transform_0, window_bounds = array<i64: 1, 4, 1, 8, 2, 8>}, {pipeline_mode = #tpu.pipeline_mode<synchronous>, transform_indices = @transform_1, window_bounds = array<i64: 32, 256>}, {pipeline_mode = #tpu.pipeline_mode<synchronous>, transform_indices = @transform_2, window_bounds = array<i64: 1, 32>}, {transform_indices = @transform_3, window_bounds = array<i64: 1, 1, 2, 32>}]} {
    %c0 = arith.constant 0 : index
    %c0_0 = arith.constant 0 : index
    %c0_1 = arith.constant 0 : index
    %c0_2 = arith.constant 0 : index
    %c0_3 = arith.constant 0 : index
    %c0_4 = arith.constant 0 : index
    %0 = vector.load %arg2[%c0, %c0_0, %c0_1, %c0_2, %c0_3, %c0_4] : memref<1x4x1x8x2x8xf32, #tpu.memory_space<vmem>>, vector<1x1x1x1x2x8xf32>
    %1 = vector.shape_cast %0 : vector<1x1x1x1x2x8xf32> to vector<2x8xf32>
    %c0_5 = arith.constant 0 : index
    %c0_6 = arith.constant 0 : index
    %2 = vector.load %arg6[%c0_5, %c0_6] : memref<2x256xf32, #tpu.memory_space<vmem>>, vector<2x8xf32>
    tpu.vector_store %arg6[%c0_5, %c0_6], %1 {strides = array<i32>} : memref<2x256xf32, #tpu.memory_space<vmem>>, vector<2x8xf32>,
    %c0_7 = arith.constant 0 : index
    %c0_8 = arith.constant 0 : index
    %c0_9 = arith.constant 0 : index
    %c1 = arith.constant 1 : index
    %c0_10 = arith.constant 0 : index
    %c0_11 = arith.constant 0 : index
    %3 = vector.load %arg2[%c0_7, %c0_8, %c0_9, %c1, %c0_10, %c0_11] : memref<1x4x1x8x2x8xf32, #tpu.memory_space<vmem>>, vector<1x1x1x1x2x8xf32>
    %4 = vector.shape_cast %3 : vector<1x1x1x1x2x8xf32> to vector<2x8xf32>
    %c0_12 = arith.constant 0 : index
    %c8 = arith.constant 8 : index
    %5 = vector.load %arg6[%c0_12, %c8] : memref<2x256xf32, #tpu.memory_space<vmem>>, vector<2x8xf32>
    tpu.vector_store %arg6[%c0_12, %c8], %4 {strides = array<i32>} : memref<2x256xf32, #tpu.memory_space<vmem>>, vector<2x8xf32>,
    %c0_13 = arith.constant 0 : index
    %c0_14 = arith.constant 0 : index
    %c0_15 = arith.constant 0 : index
    %c2 = arith.constant 2 : index
    %c0_16 = arith.constant 0 : index
    %c0_17 = arith.constant 0 : index
    %6 = vector.load %arg2[%c0_13, %c0_14, %c0_15, %c2, %c0_16, %c0_17] : memref<1x4x1x8x2x8xf32, #tpu.memory_space<vmem>>, vector<1x1x1x1x2x8xf32>
    %7 = vector.shape_cast %6 : vector<1x1x1x1x2x8xf32> to vector<2x8xf32>
    %c0_18 = arith.constant 0 : index
    %c16 = arith.constant 16 : index
    %8 = vector.load %arg6[%c0_18, %c16] : memref<2x256xf32, #tpu.memory_space<vmem>>, vector<2x8xf32>
    tpu.vector_store %arg6[%c0_18, %c16], %7 {strides = array<i32>} : memref<2x256xf32, #tpu.memory_space<vmem>>, vector<2x8xf32>,
    %c0_19 = arith.constant 0 : index
    %c0_20 = arith.constant 0 : index
    %c0_21 = arith.constant 0 : index
    %c3 = arith.constant 3 : index
    %c0_22 = arith.constant 0 : index
    %c0_23 = arith.constant 0 : index
    %9 = vector.load %arg2[%c0_19, %c0_20, %c0_21, %c3, %c0_22, %c0_23] : memref<1x4x1x8x2x8xf32, #tpu.memory_space<vmem>>, vector<1x1x1x1x2x8xf32>
    %10 = vector.shape_cast %9 : vector<1x1x1x1x2x8xf32> to vector<2x8xf32>
    %c0_24 = arith.constant 0 : index
    %c24 = arith.constant 24 : index
    %11 = vector.load %arg6[%c0_24, %c24] : memref<2x256xf32, #tpu.memory_space<vmem>>, vector<2x8xf32>
    tpu.vector_store %arg6[%c0_24, %c24], %10 {strides = array<i32>} : memref<2x256xf32, #tpu.memory_space<vmem>>, vector<2x8xf32>,
    %c0_25 = arith.constant 0 : index
    %c0_26 = arith.constant 0 : index
    %c0_27 = arith.constant 0 : index
    %c4 = arith.constant 4 : index
    %c0_28 = arith.constant 0 : index
    %c0_29 = arith.constant 0 : index
    %12 = vector.load %arg2[%c0_25, %c0_26, %c0_27, %c4, %c0_28, %c0_29] : memref<1x4x1x8x2x8xf32, #tpu.memory_space<vmem>>, vector<1x1x1x1x2x8xf32>
    %13 = vector.shape_cast %12 : vector<1x1x1x1x2x8xf32> to vector<2x8xf32>
    %c0_30 = arith.constant 0 : index
    %c32 = arith.constant 32 : index
    %14 = vector.load %arg6[%c0_30, %c32] : memref<2x256xf32, #tpu.memory_space<vmem>>, vector<2x8xf32>
    tpu.vector_store %arg6[%c0_30, %c32], %13 {strides = array<i32>} : memref<2x256xf32, #tpu.memory_space<vmem>>, vector<2x8xf32>,
    %c0_31 = arith.constant 0 : index
    %c0_32 = arith.constant 0 : index
    %c0_33 = arith.constant 0 : index
    %c5 = arith.constant 5 : index
    %c0_34 = arith.constant 0 : index
    %c0_35 = arith.constant 0 : index
    %15 = vector.load %arg2[%c0_31, %c0_32, %c0_33, %c5, %c0_34, %c0_35] : memref<1x4x1x8x2x8xf32, #tpu.memory_space<vmem>>, vector<1x1x1x1x2x8xf32>
    %16 = vector.shape_cast %15 : vector<1x1x1x1x2x8xf32> to vector<2x8xf32>
    %c0_36 = arith.constant 0 : index
    %c40 = arith.constant 40 : index
    %17 = vector.load %arg6[%c0_36, %c40] : memref<2x256xf32, #tpu.memory_space<vmem>>, vector<2x8xf32>
    tpu.vector_store %arg6[%c0_36, %c40], %16 {strides = array<i32>} : memref<2x256xf32, #tpu.memory_space<vmem>>, vector<2x8xf32>,
    %c0_37 = arith.constant 0 : index
    %c0_38 = arith.constant 0 : index
    %c0_39 = arith.constant 0 : index
    %c6 = arith.constant 6 : index
    %c0_40 = arith.constant 0 : index
    %c0_41 = arith.constant 0 : index
    %18 = vector.load %arg2[%c0_37, %c0_38, %c0_39, %c6, %c0_40, %c0_41] : memref<1x4x1x8x2x8xf32, #tpu.memory_space<vmem>>, vector<1x1x1x1x2x8xf32>
    %19 = vector.shape_cast %18 : vector<1x1x1x1x2x8xf32> to vector<2x8xf32>
    %c0_42 = arith.constant 0 : index
    %c48 = arith.constant 48 : index
    %20 = vector.load %arg6[%c0_42, %c48] : memref<2x256xf32, #tpu.memory_space<vmem>>, vector<2x8xf32>
    tpu.vector_store %arg6[%c0_42, %c48], %19 {strides = array<i32>} : memref<2x256xf32, #tpu.memory_space<vmem>>, vector<2x8xf32>,
    %c0_43 = arith.constant 0 : index
    %c0_44 = arith.constant 0 : index
    %c0_45 = arith.constant 0 : index
    %c7 = arith.constant 7 : index
    %c0_46 = arith.constant 0 : index
    %c0_47 = arith.constant 0 : index
    %21 = vector.load %arg2[%c0_43, %c0_44, %c0_45, %c7, %c0_46, %c0_47] : memref<1x4x1x8x2x8xf32, #tpu.memory_space<vmem>>, vector<1x1x1x1x2x8xf32>
    %22 = vector.shape_cast %21 : vector<1x1x1x1x2x8xf32> to vector<2x8xf32>
    %c0_48 = arith.constant 0 : index
    %c56 = arith.constant 56 : index
    %23 = vector.load %arg6[%c0_48, %c56] : memref<2x256xf32, #tpu.memory_space<vmem>>, vector<2x8xf32>
    tpu.vector_store %arg6[%c0_48, %c56], %22 {strides = array<i32>} : memref<2x256xf32, #tpu.memory_space<vmem>>, vector<2x8xf32>,
    %c0_49 = arith.constant 0 : index
    %c1_50 = arith.constant 1 : index
    %c0_51 = arith.constant 0 : index
    %c0_52 = arith.constant 0 : index
    %c0_53 = arith.constant 0 : index
    %c0_54 = arith.constant 0 : index
    %24 = vector.load %arg2[%c0_49, %c1_50, %c0_51, %c0_52, %c0_53, %c0_54] : memref<1x4x1x8x2x8xf32, #tpu.memory_space<vmem>>, vector<1x1x1x1x2x8xf32>
    %25 = vector.shape_cast %24 : vector<1x1x1x1x2x8xf32> to vector<2x8xf32>
    %c0_55 = arith.constant 0 : index
    %c64 = arith.constant 64 : index
    %26 = vector.load %arg6[%c0_55, %c64] : memref<2x256xf32, #tpu.memory_space<vmem>>, vector<2x8xf32>
    tpu.vector_store %arg6[%c0_55, %c64], %25 {strides = array<i32>} : memref<2x256xf32, #tpu.memory_space<vmem>>, vector<2x8xf32>,
    %c0_56 = arith.constant 0 : index
    %c1_57 = arith.constant 1 : index
    %c0_58 = arith.constant 0 : index
    %c1_59 = arith.constant 1 : index
    %c0_60 = arith.constant 0 : index
    %c0_61 = arith.constant 0 : index
    %27 = vector.load %arg2[%c0_56, %c1_57, %c0_58, %c1_59, %c0_60, %c0_61] : memref<1x4x1x8x2x8xf32, #tpu.memory_space<vmem>>, vector<1x1x1x1x2x8xf32>
    %28 = vector.shape_cast %27 : vector<1x1x1x1x2x8xf32> to vector<2x8xf32>
    %c0_62 = arith.constant 0 : index
    %c72 = arith.constant 72 : index
    %29 = vector.load %arg6[%c0_62, %c72] : memref<2x256xf32, #tpu.memory_space<vmem>>, vector<2x8xf32>
    tpu.vector_store %arg6[%c0_62, %c72], %28 {strides = array<i32>} : memref<2x256xf32, #tpu.memory_space<vmem>>, vector<2x8xf32>,
    %c0_63 = arith.constant 0 : index
    %c1_64 = arith.constant 1 : index
    %c0_65 = arith.constant 0 : index
    %c2_66 = arith.constant 2 : index
    %c0_67 = arith.constant 0 : index
    %c0_68 = arith.constant 0 : index
    %30 = vector.load %arg2[%c0_63, %c1_64, %c0_65, %c2_66, %c0_67, %c0_68] : memref<1x4x1x8x2x8xf32, #tpu.memory_space<vmem>>, vector<1x1x1x1x2x8xf32>
    %31 = vector.shape_cast %30 : vector<1x1x1x1x2x8xf32> to vector<2x8xf32>
    %c0_69 = arith.constant 0 : index
    %c80 = arith.constant 80 : index
    %32 = vector.load %arg6[%c0_69, %c80] : memref<2x256xf32, #tpu.memory_space<vmem>>, vector<2x8xf32>
    tpu.vector_store %arg6[%c0_69, %c80], %31 {strides = array<i32>} : memref<2x256xf32, #tpu.memory_space<vmem>>, vector<2x8xf32>,
    %c0_70 = arith.constant 0 : index
    %c1_71 = arith.constant 1 : index
    %c0_72 = arith.constant 0 : index
    %c3_73 = arith.constant 3 : index
    %c0_74 = arith.constant 0 : index
    %c0_75 = arith.constant 0 : index
    %33 = vector.load %arg2[%c0_70, %c1_71, %c0_72, %c3_73, %c0_74, %c0_75] : memref<1x4x1x8x2x8xf32, #tpu.memory_space<vmem>>, vector<1x1x1x1x2x8xf32>
    %34 = vector.shape_cast %33 : vector<1x1x1x1x2x8xf32> to vector<2x8xf32>
    %c0_76 = arith.constant 0 : index
    %c88 = arith.constant 88 : index
    %35 = vector.load %arg6[%c0_76, %c88] : memref<2x256xf32, #tpu.memory_space<vmem>>, vector<2x8xf32>
    tpu.vector_store %arg6[%c0_76, %c88], %34 {strides = array<i32>} : memref<2x256xf32, #tpu.memory_space<vmem>>, vector<2x8xf32>,
    %c0_77 = arith.constant 0 : index
    %c1_78 = arith.constant 1 : index
    %c0_79 = arith.constant 0 : index
    %c4_80 = arith.constant 4 : index
    %c0_81 = arith.constant 0 : index
    %c0_82 = arith.constant 0 : index
    %36 = vector.load %arg2[%c0_77, %c1_78, %c0_79, %c4_80, %c0_81, %c0_82] : memref<1x4x1x8x2x8xf32, #tpu.memory_space<vmem>>, vector<1x1x1x1x2x8xf32>
    %37 = vector.shape_cast %36 : vector<1x1x1x1x2x8xf32> to vector<2x8xf32>
    %c0_83 = arith.constant 0 : index
    %c96 = arith.constant 96 : index
    %38 = vector.load %arg6[%c0_83, %c96] : memref<2x256xf32, #tpu.memory_space<vmem>>, vector<2x8xf32>
    tpu.vector_store %arg6[%c0_83, %c96], %37 {strides = array<i32>} : memref<2x256xf32, #tpu.memory_space<vmem>>, vector<2x8xf32>,
    %c0_84 = arith.constant 0 : index
    %c1_85 = arith.constant 1 : index
    %c0_86 = arith.constant 0 : index
    %c5_87 = arith.constant 5 : index
    %c0_88 = arith.constant 0 : index
    %c0_89 = arith.constant 0 : index
    %39 = vector.load %arg2[%c0_84, %c1_85, %c0_86, %c5_87, %c0_88, %c0_89] : memref<1x4x1x8x2x8xf32, #tpu.memory_space<vmem>>, vector<1x1x1x1x2x8xf32>
    %40 = vector.shape_cast %39 : vector<1x1x1x1x2x8xf32> to vector<2x8xf32>
    %c0_90 = arith.constant 0 : index
    %c104 = arith.constant 104 : index
    %41 = vector.load %arg6[%c0_90, %c104] : memref<2x256xf32, #tpu.memory_space<vmem>>, vector<2x8xf32>
    tpu.vector_store %arg6[%c0_90, %c104], %40 {strides = array<i32>} : memref<2x256xf32, #tpu.memory_space<vmem>>, vector<2x8xf32>,
    %c0_91 = arith.constant 0 : index
    %c1_92 = arith.constant 1 : index
    %c0_93 = arith.constant 0 : index
    %c6_94 = arith.constant 6 : index
    %c0_95 = arith.constant 0 : index
    %c0_96 = arith.constant 0 : index
    %42 = vector.load %arg2[%c0_91, %c1_92, %c0_93, %c6_94, %c0_95, %c0_96] : memref<1x4x1x8x2x8xf32, #tpu.memory_space<vmem>>, vector<1x1x1x1x2x8xf32>
    %43 = vector.shape_cast %42 : vector<1x1x1x1x2x8xf32> to vector<2x8xf32>
    %c0_97 = arith.constant 0 : index
    %c112 = arith.constant 112 : index
    %44 = vector.load %arg6[%c0_97, %c112] : memref<2x256xf32, #tpu.memory_space<vmem>>, vector<2x8xf32>
    tpu.vector_store %arg6[%c0_97, %c112], %43 {strides = array<i32>} : memref<2x256xf32, #tpu.memory_space<vmem>>, vector<2x8xf32>,
    %c0_98 = arith.constant 0 : index
    %c1_99 = arith.constant 1 : index
    %c0_100 = arith.constant 0 : index
    %c7_101 = arith.constant 7 : index
    %c0_102 = arith.constant 0 : index
    %c0_103 = arith.constant 0 : index
    %45 = vector.load %arg2[%c0_98, %c1_99, %c0_100, %c7_101, %c0_102, %c0_103] : memref<1x4x1x8x2x8xf32, #tpu.memory_space<vmem>>, vector<1x1x1x1x2x8xf32>
    %46 = vector.shape_cast %45 : vector<1x1x1x1x2x8xf32> to vector<2x8xf32>
    %c0_104 = arith.constant 0 : index
    %c120 = arith.constant 120 : index
    %47 = vector.load %arg6[%c0_104, %c120] : memref<2x256xf32, #tpu.memory_space<vmem>>, vector<2x8xf32>
    tpu.vector_store %arg6[%c0_104, %c120], %46 {strides = array<i32>} : memref<2x256xf32, #tpu.memory_space<vmem>>, vector<2x8xf32>,
    %c0_105 = arith.constant 0 : index
    %c2_106 = arith.constant 2 : index
    %c0_107 = arith.constant 0 : index
    %c0_108 = arith.constant 0 : index
    %c0_109 = arith.constant 0 : index
    %c0_110 = arith.constant 0 : index
    %48 = vector.load %arg2[%c0_105, %c2_106, %c0_107, %c0_108, %c0_109, %c0_110] : memref<1x4x1x8x2x8xf32, #tpu.memory_space<vmem>>, vector<1x1x1x1x2x8xf32>
    %49 = vector.shape_cast %48 : vector<1x1x1x1x2x8xf32> to vector<2x8xf32>
    %c0_111 = arith.constant 0 : index
    %c128 = arith.constant 128 : index
    %50 = vector.load %arg6[%c0_111, %c128] : memref<2x256xf32, #tpu.memory_space<vmem>>, vector<2x8xf32>
    tpu.vector_store %arg6[%c0_111, %c128], %49 {strides = array<i32>} : memref<2x256xf32, #tpu.memory_space<vmem>>, vector<2x8xf32>,
    %c0_112 = arith.constant 0 : index
    %c2_113 = arith.constant 2 : index
    %c0_114 = arith.constant 0 : index
    %c1_115 = arith.constant 1 : index
    %c0_116 = arith.constant 0 : index
    %c0_117 = arith.constant 0 : index
    %51 = vector.load %arg2[%c0_112, %c2_113, %c0_114, %c1_115, %c0_116, %c0_117] : memref<1x4x1x8x2x8xf32, #tpu.memory_space<vmem>>, vector<1x1x1x1x2x8xf32>
    %52 = vector.shape_cast %51 : vector<1x1x1x1x2x8xf32> to vector<2x8xf32>
    %c0_118 = arith.constant 0 : index
    %c136 = arith.constant 136 : index
    %53 = vector.load %arg6[%c0_118, %c136] : memref<2x256xf32, #tpu.memory_space<vmem>>, vector<2x8xf32>
    tpu.vector_store %arg6[%c0_118, %c136], %52 {strides = array<i32>} : memref<2x256xf32, #tpu.memory_space<vmem>>, vector<2x8xf32>,
    %c0_119 = arith.constant 0 : index
    %c2_120 = arith.constant 2 : index
    %c0_121 = arith.constant 0 : index
    %c2_122 = arith.constant 2 : index
    %c0_123 = arith.constant 0 : index
    %c0_124 = arith.constant 0 : index
    %54 = vector.load %arg2[%c0_119, %c2_120, %c0_121, %c2_122, %c0_123, %c0_124] : memref<1x4x1x8x2x8xf32, #tpu.memory_space<vmem>>, vector<1x1x1x1x2x8xf32>
    %55 = vector.shape_cast %54 : vector<1x1x1x1x2x8xf32> to vector<2x8xf32>
    %c0_125 = arith.constant 0 : index
    %c144 = arith.constant 144 : index
    %56 = vector.load %arg6[%c0_125, %c144] : memref<2x256xf32, #tpu.memory_space<vmem>>, vector<2x8xf32>
    tpu.vector_store %arg6[%c0_125, %c144], %55 {strides = array<i32>} : memref<2x256xf32, #tpu.memory_space<vmem>>, vector<2x8xf32>,
    %c0_126 = arith.constant 0 : index
    %c2_127 = arith.constant 2 : index
    %c0_128 = arith.constant 0 : index
    %c3_129 = arith.constant 3 : index
    %c0_130 = arith.constant 0 : index
    %c0_131 = arith.constant 0 : index
    %57 = vector.load %arg2[%c0_126, %c2_127, %c0_128, %c3_129, %c0_130, %c0_131] : memref<1x4x1x8x2x8xf32, #tpu.memory_space<vmem>>, vector<1x1x1x1x2x8xf32>
    %58 = vector.shape_cast %57 : vector<1x1x1x1x2x8xf32> to vector<2x8xf32>
    %c0_132 = arith.constant 0 : index
    %c152 = arith.constant 152 : index
    %59 = vector.load %arg6[%c0_132, %c152] : memref<2x256xf32, #tpu.memory_space<vmem>>, vector<2x8xf32>
    tpu.vector_store %arg6[%c0_132, %c152], %58 {strides = array<i32>} : memref<2x256xf32, #tpu.memory_space<vmem>>, vector<2x8xf32>,
    %c0_133 = arith.constant 0 : index
    %c2_134 = arith.constant 2 : index
    %c0_135 = arith.constant 0 : index
    %c4_136 = arith.constant 4 : index
    %c0_137 = arith.constant 0 : index
    %c0_138 = arith.constant 0 : index
    %60 = vector.load %arg2[%c0_133, %c2_134, %c0_135, %c4_136, %c0_137, %c0_138] : memref<1x4x1x8x2x8xf32, #tpu.memory_space<vmem>>, vector<1x1x1x1x2x8xf32>
    %61 = vector.shape_cast %60 : vector<1x1x1x1x2x8xf32> to vector<2x8xf32>
    %c0_139 = arith.constant 0 : index
    %c160 = arith.constant 160 : index
    %62 = vector.load %arg6[%c0_139, %c160] : memref<2x256xf32, #tpu.memory_space<vmem>>, vector<2x8xf32>
    tpu.vector_store %arg6[%c0_139, %c160], %61 {strides = array<i32>} : memref<2x256xf32, #tpu.memory_space<vmem>>, vector<2x8xf32>,
    %c0_140 = arith.constant 0 : index
    %c2_141 = arith.constant 2 : index
    %c0_142 = arith.constant 0 : index
    %c5_143 = arith.constant 5 : index
    %c0_144 = arith.constant 0 : index
    %c0_145 = arith.constant 0 : index
    %63 = vector.load %arg2[%c0_140, %c2_141, %c0_142, %c5_143, %c0_144, %c0_145] : memref<1x4x1x8x2x8xf32, #tpu.memory_space<vmem>>, vector<1x1x1x1x2x8xf32>
    %64 = vector.shape_cast %63 : vector<1x1x1x1x2x8xf32> to vector<2x8xf32>
    %c0_146 = arith.constant 0 : index
    %c168 = arith.constant 168 : index
    %65 = vector.load %arg6[%c0_146, %c168] : memref<2x256xf32, #tpu.memory_space<vmem>>, vector<2x8xf32>
    tpu.vector_store %arg6[%c0_146, %c168], %64 {strides = array<i32>} : memref<2x256xf32, #tpu.memory_space<vmem>>, vector<2x8xf32>,
    %c0_147 = arith.constant 0 : index
    %c2_148 = arith.constant 2 : index
    %c0_149 = arith.constant 0 : index
    %c6_150 = arith.constant 6 : index
    %c0_151 = arith.constant 0 : index
    %c0_152 = arith.constant 0 : index
    %66 = vector.load %arg2[%c0_147, %c2_148, %c0_149, %c6_150, %c0_151, %c0_152] : memref<1x4x1x8x2x8xf32, #tpu.memory_space<vmem>>, vector<1x1x1x1x2x8xf32>
    %67 = vector.shape_cast %66 : vector<1x1x1x1x2x8xf32> to vector<2x8xf32>
    %c0_153 = arith.constant 0 : index
    %c176 = arith.constant 176 : index
    %68 = vector.load %arg6[%c0_153, %c176] : memref<2x256xf32, #tpu.memory_space<vmem>>, vector<2x8xf32>
    tpu.vector_store %arg6[%c0_153, %c176], %67 {strides = array<i32>} : memref<2x256xf32, #tpu.memory_space<vmem>>, vector<2x8xf32>,
    %c0_154 = arith.constant 0 : index
    %c2_155 = arith.constant 2 : index
    %c0_156 = arith.constant 0 : index
    %c7_157 = arith.constant 7 : index
    %c0_158 = arith.constant 0 : index
    %c0_159 = arith.constant 0 : index
    %69 = vector.load %arg2[%c0_154, %c2_155, %c0_156, %c7_157, %c0_158, %c0_159] : memref<1x4x1x8x2x8xf32, #tpu.memory_space<vmem>>, vector<1x1x1x1x2x8xf32>
    %70 = vector.shape_cast %69 : vector<1x1x1x1x2x8xf32> to vector<2x8xf32>
    %c0_160 = arith.constant 0 : index
    %c184 = arith.constant 184 : index
    %71 = vector.load %arg6[%c0_160, %c184] : memref<2x256xf32, #tpu.memory_space<vmem>>, vector<2x8xf32>
    tpu.vector_store %arg6[%c0_160, %c184], %70 {strides = array<i32>} : memref<2x256xf32, #tpu.memory_space<vmem>>, vector<2x8xf32>,
    %c0_161 = arith.constant 0 : index
    %c3_162 = arith.constant 3 : index
    %c0_163 = arith.constant 0 : index
    %c0_164 = arith.constant 0 : index
    %c0_165 = arith.constant 0 : index
    %c0_166 = arith.constant 0 : index
    %72 = vector.load %arg2[%c0_161, %c3_162, %c0_163, %c0_164, %c0_165, %c0_166] : memref<1x4x1x8x2x8xf32, #tpu.memory_space<vmem>>, vector<1x1x1x1x2x8xf32>
    %73 = vector.shape_cast %72 : vector<1x1x1x1x2x8xf32> to vector<2x8xf32>
    %c0_167 = arith.constant 0 : index
    %c192 = arith.constant 192 : index
    %74 = vector.load %arg6[%c0_167, %c192] : memref<2x256xf32, #tpu.memory_space<vmem>>, vector<2x8xf32>
    tpu.vector_store %arg6[%c0_167, %c192], %73 {strides = array<i32>} : memref<2x256xf32, #tpu.memory_space<vmem>>, vector<2x8xf32>,
    %c0_168 = arith.constant 0 : index
    %c3_169 = arith.constant 3 : index
    %c0_170 = arith.constant 0 : index
    %c1_171 = arith.constant 1 : index
    %c0_172 = arith.constant 0 : index
    %c0_173 = arith.constant 0 : index
    %75 = vector.load %arg2[%c0_168, %c3_169, %c0_170, %c1_171, %c0_172, %c0_173] : memref<1x4x1x8x2x8xf32, #tpu.memory_space<vmem>>, vector<1x1x1x1x2x8xf32>
    %76 = vector.shape_cast %75 : vector<1x1x1x1x2x8xf32> to vector<2x8xf32>
    %c0_174 = arith.constant 0 : index
    %c200 = arith.constant 200 : index
    %77 = vector.load %arg6[%c0_174, %c200] : memref<2x256xf32, #tpu.memory_space<vmem>>, vector<2x8xf32>
    tpu.vector_store %arg6[%c0_174, %c200], %76 {strides = array<i32>} : memref<2x256xf32, #tpu.memory_space<vmem>>, vector<2x8xf32>,
    %c0_175 = arith.constant 0 : index
    %c3_176 = arith.constant 3 : index
    %c0_177 = arith.constant 0 : index
    %c2_178 = arith.constant 2 : index
    %c0_179 = arith.constant 0 : index
    %c0_180 = arith.constant 0 : index
    %78 = vector.load %arg2[%c0_175, %c3_176, %c0_177, %c2_178, %c0_179, %c0_180] : memref<1x4x1x8x2x8xf32, #tpu.memory_space<vmem>>, vector<1x1x1x1x2x8xf32>
    %79 = vector.shape_cast %78 : vector<1x1x1x1x2x8xf32> to vector<2x8xf32>
    %c0_181 = arith.constant 0 : index
    %c208 = arith.constant 208 : index
    %80 = vector.load %arg6[%c0_181, %c208] : memref<2x256xf32, #tpu.memory_space<vmem>>, vector<2x8xf32>
    tpu.vector_store %arg6[%c0_181, %c208], %79 {strides = array<i32>} : memref<2x256xf32, #tpu.memory_space<vmem>>, vector<2x8xf32>,
    %c0_182 = arith.constant 0 : index
    %c3_183 = arith.constant 3 : index
    %c0_184 = arith.constant 0 : index
    %c3_185 = arith.constant 3 : index
    %c0_186 = arith.constant 0 : index
    %c0_187 = arith.constant 0 : index
    %81 = vector.load %arg2[%c0_182, %c3_183, %c0_184, %c3_185, %c0_186, %c0_187] : memref<1x4x1x8x2x8xf32, #tpu.memory_space<vmem>>, vector<1x1x1x1x2x8xf32>
    %82 = vector.shape_cast %81 : vector<1x1x1x1x2x8xf32> to vector<2x8xf32>
    %c0_188 = arith.constant 0 : index
    %c216 = arith.constant 216 : index
    %83 = vector.load %arg6[%c0_188, %c216] : memref<2x256xf32, #tpu.memory_space<vmem>>, vector<2x8xf32>
    tpu.vector_store %arg6[%c0_188, %c216], %82 {strides = array<i32>} : memref<2x256xf32, #tpu.memory_space<vmem>>, vector<2x8xf32>,
    %c0_189 = arith.constant 0 : index
    %c3_190 = arith.constant 3 : index
    %c0_191 = arith.constant 0 : index
    %c4_192 = arith.constant 4 : index
    %c0_193 = arith.constant 0 : index
    %c0_194 = arith.constant 0 : index
    %84 = vector.load %arg2[%c0_189, %c3_190, %c0_191, %c4_192, %c0_193, %c0_194] : memref<1x4x1x8x2x8xf32, #tpu.memory_space<vmem>>, vector<1x1x1x1x2x8xf32>
    %85 = vector.shape_cast %84 : vector<1x1x1x1x2x8xf32> to vector<2x8xf32>
    %c0_195 = arith.constant 0 : index
    %c224 = arith.constant 224 : index
    %86 = vector.load %arg6[%c0_195, %c224] : memref<2x256xf32, #tpu.memory_space<vmem>>, vector<2x8xf32>
    tpu.vector_store %arg6[%c0_195, %c224], %85 {strides = array<i32>} : memref<2x256xf32, #tpu.memory_space<vmem>>, vector<2x8xf32>,
    %c0_196 = arith.constant 0 : index
    %c3_197 = arith.constant 3 : index
    %c0_198 = arith.constant 0 : index
    %c5_199 = arith.constant 5 : index
    %c0_200 = arith.constant 0 : index
    %c0_201 = arith.constant 0 : index
    %87 = vector.load %arg2[%c0_196, %c3_197, %c0_198, %c5_199, %c0_200, %c0_201] : memref<1x4x1x8x2x8xf32, #tpu.memory_space<vmem>>, vector<1x1x1x1x2x8xf32>
    %88 = vector.shape_cast %87 : vector<1x1x1x1x2x8xf32> to vector<2x8xf32>
    %c0_202 = arith.constant 0 : index
    %c232 = arith.constant 232 : index
    %89 = vector.load %arg6[%c0_202, %c232] : memref<2x256xf32, #tpu.memory_space<vmem>>, vector<2x8xf32>
    tpu.vector_store %arg6[%c0_202, %c232], %88 {strides = array<i32>} : memref<2x256xf32, #tpu.memory_space<vmem>>, vector<2x8xf32>,
    %c0_203 = arith.constant 0 : index
    %c3_204 = arith.constant 3 : index
    %c0_205 = arith.constant 0 : index
    %c6_206 = arith.constant 6 : index
    %c0_207 = arith.constant 0 : index
    %c0_208 = arith.constant 0 : index
    %90 = vector.load %arg2[%c0_203, %c3_204, %c0_205, %c6_206, %c0_207, %c0_208] : memref<1x4x1x8x2x8xf32, #tpu.memory_space<vmem>>, vector<1x1x1x1x2x8xf32>
    %91 = vector.shape_cast %90 : vector<1x1x1x1x2x8xf32> to vector<2x8xf32>
    %c0_209 = arith.constant 0 : index
    %c240 = arith.constant 240 : index
    %92 = vector.load %arg6[%c0_209, %c240] : memref<2x256xf32, #tpu.memory_space<vmem>>, vector<2x8xf32>
    tpu.vector_store %arg6[%c0_209, %c240], %91 {strides = array<i32>} : memref<2x256xf32, #tpu.memory_space<vmem>>, vector<2x8xf32>,
    %c0_210 = arith.constant 0 : index
    %c3_211 = arith.constant 3 : index
    %c0_212 = arith.constant 0 : index
    %c7_213 = arith.constant 7 : index
    %c0_214 = arith.constant 0 : index
    %c0_215 = arith.constant 0 : index
    %93 = vector.load %arg2[%c0_210, %c3_211, %c0_212, %c7_213, %c0_214, %c0_215] : memref<1x4x1x8x2x8xf32, #tpu.memory_space<vmem>>, vector<1x1x1x1x2x8xf32>
    %94 = vector.shape_cast %93 : vector<1x1x1x1x2x8xf32> to vector<2x8xf32>
    %c0_216 = arith.constant 0 : index
    %c248 = arith.constant 248 : index
    %95 = vector.load %arg6[%c0_216, %c248] : memref<2x256xf32, #tpu.memory_space<vmem>>, vector<2x8xf32>
    tpu.vector_store %arg6[%c0_216, %c248], %94 {strides = array<i32>} : memref<2x256xf32, #tpu.memory_space<vmem>>, vector<2x8xf32>,
    %c0_217 = arith.constant 0 : index
    %c0_218 = arith.constant 0 : index
    %96 = vector.load %arg6[%c0_217, %c0_218] : memref<2x256xf32, #tpu.memory_space<vmem>>, vector<2x256xf32>
    %c0_219 = arith.constant 0 : index
    %c0_220 = arith.constant 0 : index
    %97 = vector.load %arg3[%c0_219, %c0_220] : memref<32x256xf32, #tpu.memory_space<vmem>>, vector<32x256xf32>
    %cst = arith.constant dense<0.000000e+00> : vector<2x32xf32>
    %98 = tpu.matmul %96, %97, %cst {dimension_numbers = #tpu.dot_dimension_numbers<[1], [1], [0], [0], [0, 0, 1, 0], [], []>} : vector<2x256xf32>, vector<32x256xf32>, vector<2x32xf32> -> vector<2x32xf32>
    %c0_221 = arith.constant 0 : index
    %c0_222 = arith.constant 0 : index
    %99 = vector.load %arg4[%c0_221, %c0_222] : memref<1x32xf32, #tpu.memory_space<vmem>>, vector<1x32xf32>
    %100 = vector.broadcast %99 : vector<1x32xf32> to vector<2x32xf32>
    %101 = arith.addf %98, %100 : vector<2x32xf32>
    %c0_223 = arith.constant 0 : index
    %c0_224 = arith.constant 0 : index
    %c0_225 = arith.constant 0 : index
    %c0_226 = arith.constant 0 : index
    %102 = vector.load %arg5[%c0_223, %c0_224, %c0_225, %c0_226] : memref<1x1x2x32xf32, #tpu.memory_space<vmem>>, vector<1x1x2x32xf32>
    %103 = vector.shape_cast %102 : vector<1x1x2x32xf32> to vector<2x32xf32>
    %104 = vector.shape_cast %101 : vector<2x32xf32> to vector<1x1x2x32xf32>
    tpu.vector_store %arg5[%c0_223, %c0_224, %c0_225, %c0_226], %104 {strides = array<i32>} : memref<1x1x2x32xf32, #tpu.memory_space<vmem>>, vector<1x1x2x32xf32>,
    return
  }
  func.func @transform_0(%arg0: i32, %arg1: i32) -> (i32, i32, i32, i32, i32, i32) {
    %c0_i32 = arith.constant 0 : i32
    %c0_i32_0 = arith.constant 0 : i32
    %c0_i32_1 = arith.constant 0 : i32
    %c0_i32_2 = arith.constant 0 : i32
    %c0_i32_3 = arith.constant 0 : i32
    return %arg0, %c0_i32, %arg1, %c0_i32_0, %c0_i32_1, %c0_i32_2 : i32, i32, i32, i32, i32, i32
  }
  func.func @transform_1(%arg0: i32, %arg1: i32) -> (i32, i32) {
    %c0_i32 = arith.constant 0 : i32
    %c0_i32_0 = arith.constant 0 : i32
    %c0_i32_1 = arith.constant 0 : i32
    return %c0_i32, %c0_i32_0 : i32, i32
  }
  func.func @transform_2(%arg0: i32, %arg1: i32) -> (i32, i32) {
    %c0_i32 = arith.constant 0 : i32
    %c0_i32_0 = arith.constant 0 : i32
    %c0_i32_1 = arith.constant 0 : i32
    return %c0_i32, %c0_i32_0 : i32, i32
  }
  func.func @transform_3(%arg0: i32, %arg1: i32) -> (i32, i32, i32, i32) {
    %c0_i32 = arith.constant 0 : i32
    %c0_i32_0 = arith.constant 0 : i32
    %c0_i32_1 = arith.constant 0 : i32
    return %arg0, %arg1, %c0_i32, %c0_i32_0 : i32, i32, i32, i32
  }
}

</mosaic_0001>

<llo_original>
// kernel: udop_patch_embeddings.1
$region0: #{udop_patch_embeddings.1}
  #allocation0 [shape = 'u32[]', space=smem, size = 0x4, offset = 0x4, fixed_abs, tag = 'smem constant byte address 0x4 - core index']
  #allocation1 [shape = 'u32[72,128]{1,0:T(1,128)}', space=vmem, size = 0x9000, scoped, tag = 'internal scratch']
  #allocation2 [shape = 'f32[2,256]{1,0:T(2,128)}', space=vmem, size = 0x800, scoped, tag = 'scratch operand']
  %s0 = inlined_call_operand.vmem [shape: f32[2,4,2,8,2,8], index: 0, kind: input, shape index: {}]
  %s1 = inlined_call_operand.vmem [shape: f32[32,256], index: 1, kind: input, shape index: {}]
  %s2 = inlined_call_operand.vmem [shape: f32[1,32], index: 2, kind: input, shape index: {}]
  %s3 = inlined_call_operand.hbm [shape: f32[2,2,2,32], index: 3, kind: output, shape index: {}]
  %s4 = sld [smem:[#allocation0]]
  $region86: #{udop_patch_embeddings.1} parent=0
    _
  %s6 = ssub.s32 1, %s4
  %s7 = scalar_select 0, %s6, %s4
  $region1: #{udop_patch_embeddings.1} parent=0
    #allocation3 [shape = 'u8[65536]{0}', space=vmem, size = 0x10000, scoped, tag = 'input window, operand 0']
    #allocation4 [shape = 'u8[2048]{0}', space=vmem, size = 0x800, scoped, tag = 'output window, operand 0']
    #allocation5 [shape = 's32[2]{0}', space=sflag, size = 0x8, scoped, tag = 'scoped memory for udop_patch_embeddings.1']
    %8 = vsyncpa [#allocation5], 0
    %s9 = scalar_lea.sflag [#allocation5], 1
    %10 = vsyncpa %s9, 0
    loop: start=0, step=1, limit=6
    $region2: #{udop_patch_embeddings.1} parent=1 // loop_pre_header
      _
    $region3: #{udop_patch_embeddings.1} parent=1 // loop_header
      %s12 = sphi 0, %s16
      %p13 = scmp.ge.s32.totalorder %s12, 6
      %s19 = sphi 0, %s31
      %s20 = sphi 0, %s27
      %s21 = sphi 0, %s19
      %s22 = sphi 0, %s20
      %s23 = sphi 0, %s21
      %s24 = sphi 0, %s22
      %s36 = sphi 0, %s38
      %s39 = sphi 0, %s36
      %s40 = sphi 0, %s39
      %s56 = sphi 0, %s40
      %s60 = sphi 0, %s60
      %s62 = sphi 0, %s60
      %s63 = sphi 0, %s62
      %s77 = sphi 0, %s63
      %s81 = sphi 0, %s81
      %s83 = sphi 0, %s81
      %s84 = sphi 0, %s83
      %s98 = sphi 0, %s84
      %s106 = sphi 0, %s108
      %s109 = sphi 0, %s106
      %s110 = sphi 0, %s109
      %s126 = sphi 0, %s110
    $region4: #{udop_patch_embeddings.1} parent=1 // loop_header_branch
      %15 = sbr.rel (%p13) target = $region8
    $region5: #{udop_patch_embeddings.1} parent=1 // loop_body
      %s17 = ssub.s32 %s12, 1
      %s18 = ssub.s32 %s12, 2
      %s25 = sadd.s32 1, %s20
      %p26 = scmp.ge.s32.totalorder %s25, 2
      %s27 = scalar_select %p26, 0, %s25
      %s28 = sadd.s32 1, %s19
      %s29 = scalar_select %p26, %s28, %s19
      %p30 = scmp.ge.s32.totalorder %s29, 2
      %s31 = scalar_select %p30, 0, %s29
      %s32 = ssub.s32 %s19, %s31
      %s33 = ssub.s32 %s20, %s27
      %s34 = sor.u32 %s32, %s33
      %p35 = scmp.eq.s32.totalorder %s34, 0
      %s37 = sadd.s32 %s36, 1
      %s38 = scalar_select %p35, %s36, %s37
      %p41 = pneg %p35
      %p42 = scmp.eq.s32.totalorder %s12, 3
      %p43 = por %p41, %p42
      %p44 = scmp.ne.s32.totalorder %s36, %s39
      %p45 = scmp.eq.s32.totalorder %s12, 0
      %p46 = por %p44, %p45
      %p47 = scmp.ne.s32.totalorder %s36, %s39
      %p48 = scmp.eq.s32.totalorder %s17, 3
      %p49 = por %p47, %p48
      %p50 = scmp.ne.s32.totalorder %s39, %s40
      %p51 = scmp.eq.s32.totalorder %s17, 0
      %p52 = por %p50, %p51
      %p53 = scmp.ne.s32.totalorder %s39, %s40
      %p54 = scmp.eq.s32.totalorder %s18, 3
      %p55 = por %p53, %p54
      %p57 = scmp.ne.s32.totalorder %s40, %s56
      %p58 = scmp.eq.s32.totalorder %s18, 0
      %p59 = por %p57, %p58
      %s61 = sadd.s32 %s60, 1
      %p64 = scmp.eq.s32.totalorder %s12, 3
      %p65 = scmp.ne.s32.totalorder %s60, %s62
      %p66 = scmp.eq.s32.totalorder %s12, 0
      %p67 = por %p65, %p66
      %p68 = scmp.ne.s32.totalorder %s60, %s62
      %p69 = scmp.eq.s32.totalorder %s17, 3
      %p70 = por %p68, %p69
      %p71 = scmp.ne.s32.totalorder %s62, %s63
      %p72 = scmp.eq.s32.totalorder %s17, 0
      %p73 = por %p71, %p72
      %p74 = scmp.ne.s32.totalorder %s62, %s63
      %p75 = scmp.eq.s32.totalorder %s18, 3
      %p76 = por %p74, %p75
      %p78 = scmp.ne.s32.totalorder %s63, %s77
      %p79 = scmp.eq.s32.totalorder %s18, 0
      %p80 = por %p78, %p79
      %s82 = sadd.s32 %s81, 1
      %p85 = scmp.eq.s32.totalorder %s12, 3
      %p86 = scmp.ne.s32.totalorder %s81, %s83
      %p87 = scmp.eq.s32.totalorder %s12, 0
      %p88 = por %p86, %p87
      %p89 = scmp.ne.s32.totalorder %s81, %s83
      %p90 = scmp.eq.s32.totalorder %s17, 3
      %p91 = por %p89, %p90
      %p92 = scmp.ne.s32.totalorder %s83, %s84
      %p93 = scmp.eq.s32.totalorder %s17, 0
      %p94 = por %p92, %p93
      %p95 = scmp.ne.s32.totalorder %s83, %s84
      %p96 = scmp.eq.s32.totalorder %s18, 3
      %p97 = por %p95, %p96
      %p99 = scmp.ne.s32.totalorder %s84, %s98
      %p100 = scmp.eq.s32.totalorder %s18, 0
      %p101 = por %p99, %p100
      %s102 = ssub.s32 %s19, %s31
      %s103 = ssub.s32 %s20, %s27
      %s104 = sor.u32 %s102, %s103
      %p105 = scmp.eq.s32.totalorder %s104, 0
      %s107 = sadd.s32 %s106, 1
      %s108 = scalar_select %p105, %s106, %s107
      %p111 = pneg %p105
      %p112 = scmp.eq.s32.totalorder %s12, 3
      %p113 = por %p111, %p112
      %p114 = scmp.ne.s32.totalorder %s106, %s109
      %p115 = scmp.eq.s32.totalorder %s12, 0
      %p116 = por %p114, %p115
      %p117 = scmp.ne.s32.totalorder %s106, %s109
      %p118 = scmp.eq.s32.totalorder %s17, 3
      %p119 = por %p117, %p118
      %p120 = scmp.ne.s32.totalorder %s109, %s110
      %p121 = scmp.eq.s32.totalorder %s17, 0
      %p122 = por %p120, %p121
      %p123 = scmp.ne.s32.totalorder %s109, %s110
      %p124 = scmp.eq.s32.totalorder %s18, 3
      %p125 = por %p123, %p124
      %p127 = scmp.ne.s32.totalorder %s110, %s126
      %p128 = scmp.eq.s32.totalorder %s18, 0
      %p129 = por %p127, %p128
      %p130 = scmp.le.s32.totalorder 1, %s12
      %p131 = scmp.lt.s32.totalorder %s12, 5
      %p132 = pnand %p130, %p131
      %p133 = pneg %p132
      // Predicated region
      $region9: #{udop_patch_embeddings.1} parent=5 // pred_check
        _
      $region10: #{udop_patch_embeddings.1} parent=5 // pred_check_branch
        %135 = sbr.rel (%p132) target = $region12
      $region11: #{udop_patch_embeddings.1} parent=5 // pred_region
        %s136 = ssub.s32 %s12, 1
        // Predicated region
        $region13: #{udop_patch_embeddings.1} parent=11 // pred_check
          %p137 = pneg %p73
        $region14: #{udop_patch_embeddings.1} parent=11 // pred_check_branch
          %139 = sbr.rel (%p137) target = $region16
        $region15: #{udop_patch_embeddings.1} parent=11 // pred_region
          _
        $region16: #{udop_patch_embeddings.1} parent=11 // pred_fallthru
          _
        // Predicated region
        $region17: #{udop_patch_embeddings.1} parent=11 // pred_check
          %p140 = pneg %p94
        $region18: #{udop_patch_embeddings.1} parent=11 // pred_check_branch
          %142 = sbr.rel (%p140) target = $region20
        $region19: #{udop_patch_embeddings.1} parent=11 // pred_region
          _
        $region20: #{udop_patch_embeddings.1} parent=11 // pred_fallthru
          _
      $region12: #{udop_patch_embeddings.1} parent=5 // pred_fallthru
        _
      %p143 = scmp.lt.s32.totalorder %s12, 4
      // Predicated region
      $region21: #{udop_patch_embeddings.1} parent=5 // pred_check
        %p144 = pneg %p143
      $region22: #{udop_patch_embeddings.1} parent=5 // pred_check_branch
        %146 = sbr.rel (%p144) target = $region24
      $region23: #{udop_patch_embeddings.1} parent=5 // pred_region
        // Predicated region
        $region25: #{udop_patch_embeddings.1} parent=23 // pred_check
          %p147 = pneg %p46
        $region26: #{udop_patch_embeddings.1} parent=23 // pred_check_branch
          %149 = sbr.rel (%p147) target = $region28
        $region27: #{udop_patch_embeddings.1} parent=23 // pred_region
          %s150 = sand.u32 %s36, 1
          %s151 = sand.u32 %s36, 1
          %s152 = smul.addr %s151, 64
          %s153 = scalar_lea.vmem [#allocation3], %s152
          %s154 = smul.addr %s20, 8
          %s155 = smul.addr %s19, 64
          %s156 = sadd.s32 %s154, %s155
          %s157 = smul.addr %s156, 2
          %s158 = scalar_lea.vmem %s0, %s157
          // Predicated region
          $region29: #{udop_patch_embeddings.1} parent=27 // pred_check
            _
          $region30: #{udop_patch_embeddings.1} parent=27 // pred_check_branch
            %160 = sbr.rel (0) target = $region32
          $region31: #{udop_patch_embeddings.1} parent=27 // pred_region
            // Predicated region
            $region33: #{udop_patch_embeddings.1} parent=31 // pred_check
              _
            $region34: #{udop_patch_embeddings.1} parent=31 // pred_check_branch
              %162 = sbr.rel target = $region36
            $region35: #{udop_patch_embeddings.1} parent=31 // pred_region
              // Predicated region
              $region48: #{udop_patch_embeddings.1} parent=35 // pred_check
                _
              $region49: #{udop_patch_embeddings.1} parent=35 // pred_check_branch
                %240 = sbr.rel (0) target = $region51
              $region50: #{udop_patch_embeddings.1} parent=35 // pred_region
                loop: start=0, step=1, limit=1
                $region52: #{udop_patch_embeddings.1} parent=50 // loop_pre_header
                  _
                $region53: #{udop_patch_embeddings.1} parent=50 // loop_header
                  %s242 = sphi 0, %s246
                  %p243 = scmp.ge.s32.totalorder %s242, 1
                  %s247 = sphi %s158, %s158
                  %s248 = sphi %s153, %s153
                $region54: #{udop_patch_embeddings.1} parent=50 // loop_header_branch
                  %245 = sbr.rel (%p243) target = $region58
                $region55: #{udop_patch_embeddings.1} parent=50 // loop_body
                  _
                $region56: #{udop_patch_embeddings.1} parent=50 // loop_footer
                  %s246 = sadd.s32 1, %s242
                $region57: #{udop_patch_embeddings.1} parent=50 // loop_footer_branch
                  %241 = sbr.rel target = $region53
                $region58: #{udop_patch_embeddings.1} parent=50 // loop_exit
                  _
                %s250 = ssub.s32 4, 1
                loop: start=0, step=1, limit=1
                $region59: #{udop_patch_embeddings.1} parent=50 // loop_pre_header
                  _
                $region60: #{udop_patch_embeddings.1} parent=50 // loop_header
                  %s252 = sphi 0, %s256
                  %p253 = scmp.ge.s32.totalorder %s252, 1
                  %s257 = sphi %s158, %s158
                  %s258 = sphi %s153, %s153
                $region61: #{udop_patch_embeddings.1} parent=50 // loop_header_branch
                  %255 = sbr.rel (%p253) target = $region65
                $region62: #{udop_patch_embeddings.1} parent=50 // loop_body
                  %v259 = vld [vmem:[%s257] sm:%s250]
                  %260 = vst [vmem:[%s258] sm:%s250] %v259
                  %v261 = vld [vmem:[%s257 + $0x2] sm:%s250]
                  %262 = vst [vmem:[%s258 + $0x2] sm:%s250] %v261
                  %v263 = vld [vmem:[%s257 + $0x4] sm:%s250]
                  %264 = vst [vmem:[%s258 + $0x4] sm:%s250] %v263
                  %v265 = vld [vmem:[%s257 + $0x6] sm:%s250]
                  %266 = vst [vmem:[%s258 + $0x6] sm:%s250] %v265
                  %v267 = vld [vmem:[%s257 + $0x8] sm:%s250]
                  %268 = vst [vmem:[%s258 + $0x8] sm:%s250] %v267
                  %v269 = vld [vmem:[%s257 + $0xa] sm:%s250]
                  %270 = vst [vmem:[%s258 + $0xa] sm:%s250] %v269
                  %v271 = vld [vmem:[%s257 + $0xc] sm:%s250]
                  %272 = vst [vmem:[%s258 + $0xc] sm:%s250] %v271
                  %v273 = vld [vmem:[%s257 + $0xe] sm:%s250]
                  %274 = vst [vmem:[%s258 + $0xe] sm:%s250] %v273
                  %v275 = vld [vmem:[%s257 + $0x20] sm:%s250]
                  %276 = vst [vmem:[%s258 + $0x10] sm:%s250] %v275
                  %v277 = vld [vmem:[%s257 + $0x22] sm:%s250]
                  %278 = vst [vmem:[%s258 + $0x12] sm:%s250] %v277
                  %v279 = vld [vmem:[%s257 + $0x24] sm:%s250]
                  %280 = vst [vmem:[%s258 + $0x14] sm:%s250] %v279
                  %v281 = vld [vmem:[%s257 + $0x26] sm:%s250]
                  %282 = vst [vmem:[%s258 + $0x16] sm:%s250] %v281
                  %v283 = vld [vmem:[%s257 + $0x28] sm:%s250]
                  %284 = vst [vmem:[%s258 + $0x18] sm:%s250] %v283
                  %v285 = vld [vmem:[%s257 + $0x2a] sm:%s250]
                  %286 = vst [vmem:[%s258 + $0x1a] sm:%s250] %v285
                  %v287 = vld [vmem:[%s257 + $0x2c] sm:%s250]
                  %288 = vst [vmem:[%s258 + $0x1c] sm:%s250] %v287
                  %v289 = vld [vmem:[%s257 + $0x2e] sm:%s250]
                  %290 = vst [vmem:[%s258 + $0x1e] sm:%s250] %v289
                  %v291 = vld [vmem:[%s257 + $0x40] sm:%s250]
                  %292 = vst [vmem:[%s258 + $0x20] sm:%s250] %v291
                  %v293 = vld [vmem:[%s257 + $0x42] sm:%s250]
                  %294 = vst [vmem:[%s258 + $0x22] sm:%s250] %v293
                  %v295 = vld [vmem:[%s257 + $0x44] sm:%s250]
                  %296 = vst [vmem:[%s258 + $0x24] sm:%s250] %v295
                  %v297 = vld [vmem:[%s257 + $0x46] sm:%s250]
                  %298 = vst [vmem:[%s258 + $0x26] sm:%s250] %v297
                  %v299 = vld [vmem:[%s257 + $0x48] sm:%s250]
                  %300 = vst [vmem:[%s258 + $0x28] sm:%s250] %v299
                  %v301 = vld [vmem:[%s257 + $0x4a] sm:%s250]
                  %302 = vst [vmem:[%s258 + $0x2a] sm:%s250] %v301
                  %v303 = vld [vmem:[%s257 + $0x4c] sm:%s250]
                  %304 = vst [vmem:[%s258 + $0x2c] sm:%s250] %v303
                  %v305 = vld [vmem:[%s257 + $0x4e] sm:%s250]
                  %306 = vst [vmem:[%s258 + $0x2e] sm:%s250] %v305
                  %v307 = vld [vmem:[%s257 + $0x60] sm:%s250]
                  %308 = vst [vmem:[%s258 + $0x30] sm:%s250] %v307
                  %v309 = vld [vmem:[%s257 + $0x62] sm:%s250]
                  %310 = vst [vmem:[%s258 + $0x32] sm:%s250] %v309
                  %v311 = vld [vmem:[%s257 + $0x64] sm:%s250]
                  %312 = vst [vmem:[%s258 + $0x34] sm:%s250] %v311
                  %v313 = vld [vmem:[%s257 + $0x66] sm:%s250]
                  %314 = vst [vmem:[%s258 + $0x36] sm:%s250] %v313
                  %v315 = vld [vmem:[%s257 + $0x68] sm:%s250]
                  %316 = vst [vmem:[%s258 + $0x38] sm:%s250] %v315
                  %v317 = vld [vmem:[%s257 + $0x6a] sm:%s250]
                  %318 = vst [vmem:[%s258 + $0x3a] sm:%s250] %v317
                  %v319 = vld [vmem:[%s257 + $0x6c] sm:%s250]
                  %320 = vst [vmem:[%s258 + $0x3c] sm:%s250] %v319
                  %v321 = vld [vmem:[%s257 + $0x6e] sm:%s250]
                  %322 = vst [vmem:[%s258 + $0x3e] sm:%s250] %v321
                $region63: #{udop_patch_embeddings.1} parent=50 // loop_footer
                  %s256 = sadd.s32 1, %s252
                $region64: #{udop_patch_embeddings.1} parent=50 // loop_footer_branch
                  %251 = sbr.rel target = $region60
                $region65: #{udop_patch_embeddings.1} parent=50 // loop_exit
                  _
              $region51: #{udop_patch_embeddings.1} parent=35 // pred_fallthru
                _
            $region36: #{udop_patch_embeddings.1} parent=31 // pred_fallthru
              _
            // Predicated region
            $region37: #{udop_patch_embeddings.1} parent=31 // pred_check
              _
            $region38: #{udop_patch_embeddings.1} parent=31 // pred_check_branch
              %164 = sbr.rel (0) target = $region40
            $region39: #{udop_patch_embeddings.1} parent=31 // pred_region
              %s166 = ssub.s32 4, 1
              loop: start=0, step=1, limit=1
              $region41: #{udop_patch_embeddings.1} parent=39 // loop_pre_header
                _
              $region42: #{udop_patch_embeddings.1} parent=39 // loop_header
                %s168 = sphi 0, %s172
                %p169 = scmp.ge.s32.totalorder %s168, 1
                %s173 = sphi %s158, %s158
                %s174 = sphi %s153, %s153
              $region43: #{udop_patch_embeddings.1} parent=39 // loop_header_branch
                %171 = sbr.rel (%p169) target = $region47
              $region44: #{udop_patch_embeddings.1} parent=39 // loop_body
                %v175 = vld [vmem:[%s173] sm:%s166]
                %176 = vst [vmem:[%s174] sm:%s166] %v175
                %v177 = vld [vmem:[%s173 + $0x2] sm:%s166]
                %178 = vst [vmem:[%s174 + $0x2] sm:%s166] %v177
                %v179 = vld [vmem:[%s173 + $0x4] sm:%s166]
                %180 = vst [vmem:[%s174 + $0x4] sm:%s166] %v179
                %v181 = vld [vmem:[%s173 + $0x6] sm:%s166]
                %182 = vst [vmem:[%s174 + $0x6] sm:%s166] %v181
                %v183 = vld [vmem:[%s173 + $0x8] sm:%s166]
                %184 = vst [vmem:[%s174 + $0x8] sm:%s166] %v183
                %v185 = vld [vmem:[%s173 + $0xa] sm:%s166]
                %186 = vst [vmem:[%s174 + $0xa] sm:%s166] %v185
                %v187 = vld [vmem:[%s173 + $0xc] sm:%s166]
                %188 = vst [vmem:[%s174 + $0xc] sm:%s166] %v187
                %v189 = vld [vmem:[%s173 + $0xe] sm:%s166]
                %190 = vst [vmem:[%s174 + $0xe] sm:%s166] %v189
                %v191 = vld [vmem:[%s173 + $0x20] sm:%s166]
                %192 = vst [vmem:[%s174 + $0x10] sm:%s166] %v191
                %v193 = vld [vmem:[%s173 + $0x22] sm:%s166]
                %194 = vst [vmem:[%s174 + $0x12] sm:%s166] %v193
                %v195 = vld [vmem:[%s173 + $0x24] sm:%s166]
                %196 = vst [vmem:[%s174 + $0x14] sm:%s166] %v195
                %v197 = vld [vmem:[%s173 + $0x26] sm:%s166]
                %198 = vst [vmem:[%s174 + $0x16] sm:%s166] %v197
                %v199 = vld [vmem:[%s173 + $0x28] sm:%s166]
                %200 = vst [vmem:[%s174 + $0x18] sm:%s166] %v199
                %v201 = vld [vmem:[%s173 + $0x2a] sm:%s166]
                %202 = vst [vmem:[%s174 + $0x1a] sm:%s166] %v201
                %v203 = vld [vmem:[%s173 + $0x2c] sm:%s166]
                %204 = vst [vmem:[%s174 + $0x1c] sm:%s166] %v203
                %v205 = vld [vmem:[%s173 + $0x2e] sm:%s166]
                %206 = vst [vmem:[%s174 + $0x1e] sm:%s166] %v205
                %v207 = vld [vmem:[%s173 + $0x40] sm:%s166]
                %208 = vst [vmem:[%s174 + $0x20] sm:%s166] %v207
                %v209 = vld [vmem:[%s173 + $0x42] sm:%s166]
                %210 = vst [vmem:[%s174 + $0x22] sm:%s166] %v209
                %v211 = vld [vmem:[%s173 + $0x44] sm:%s166]
                %212 = vst [vmem:[%s174 + $0x24] sm:%s166] %v211
                %v213 = vld [vmem:[%s173 + $0x46] sm:%s166]
                %214 = vst [vmem:[%s174 + $0x26] sm:%s166] %v213
                %v215 = vld [vmem:[%s173 + $0x48] sm:%s166]
                %216 = vst [vmem:[%s174 + $0x28] sm:%s166] %v215
                %v217 = vld [vmem:[%s173 + $0x4a] sm:%s166]
                %218 = vst [vmem:[%s174 + $0x2a] sm:%s166] %v217
                %v219 = vld [vmem:[%s173 + $0x4c] sm:%s166]
                %220 = vst [vmem:[%s174 + $0x2c] sm:%s166] %v219
                %v221 = vld [vmem:[%s173 + $0x4e] sm:%s166]
                %222 = vst [vmem:[%s174 + $0x2e] sm:%s166] %v221
                %v223 = vld [vmem:[%s173 + $0x60] sm:%s166]
                %224 = vst [vmem:[%s174 + $0x30] sm:%s166] %v223
                %v225 = vld [vmem:[%s173 + $0x62] sm:%s166]
                %226 = vst [vmem:[%s174 + $0x32] sm:%s166] %v225
                %v227 = vld [vmem:[%s173 + $0x64] sm:%s166]
                %228 = vst [vmem:[%s174 + $0x34] sm:%s166] %v227
                %v229 = vld [vmem:[%s173 + $0x66] sm:%s166]
                %230 = vst [vmem:[%s174 + $0x36] sm:%s166] %v229
                %v231 = vld [vmem:[%s173 + $0x68] sm:%s166]
                %232 = vst [vmem:[%s174 + $0x38] sm:%s166] %v231
                %v233 = vld [vmem:[%s173 + $0x6a] sm:%s166]
                %234 = vst [vmem:[%s174 + $0x3a] sm:%s166] %v233
                %v235 = vld [vmem:[%s173 + $0x6c] sm:%s166]
                %236 = vst [vmem:[%s174 + $0x3c] sm:%s166] %v235
                %v237 = vld [vmem:[%s173 + $0x6e] sm:%s166]
                %238 = vst [vmem:[%s174 + $0x3e] sm:%s166] %v237
              $region45: #{udop_patch_embeddings.1} parent=39 // loop_footer
                %s172 = sadd.s32 1, %s168
              $region46: #{udop_patch_embeddings.1} parent=39 // loop_footer_branch
                %167 = sbr.rel target = $region42
              $region47: #{udop_patch_embeddings.1} parent=39 // loop_exit
                _
            $region40: #{udop_patch_embeddings.1} parent=31 // pred_fallthru
              _
          $region32: #{udop_patch_embeddings.1} parent=27 // pred_fallthru
            _
          %323 = vnop
        $region28: #{udop_patch_embeddings.1} parent=23 // pred_fallthru
          _
      $region24: #{udop_patch_embeddings.1} parent=5 // pred_fallthru
        _
      %p324 = scmp.le.s32.totalorder 1, %s12
      %p325 = scmp.lt.s32.totalorder %s12, 5
      %p326 = pnand %p324, %p325
      %p327 = pneg %p326
      // Predicated region
      $region66: #{udop_patch_embeddings.1} parent=5 // pred_check
        _
      $region67: #{udop_patch_embeddings.1} parent=5 // pred_check_branch
        %329 = sbr.rel (%p326) target = $region69
      $region68: #{udop_patch_embeddings.1} parent=5 // pred_region
        %s330 = ssub.s32 %s12, 1
        %s331 = sand.u32 %s39, 1
        %s332 = sand.u32 %s39, 1
        %s333 = smul.addr %s332, 64
        %s334 = scalar_lea.vmem [#allocation3], %s333
        // Predicated region
        $region70: #{udop_patch_embeddings.1} parent=68 // pred_check
          %p335 = pneg %p52
        $region71: #{udop_patch_embeddings.1} parent=68 // pred_check_branch
          %337 = sbr.rel (%p335) target = $region73
        $region72: #{udop_patch_embeddings.1} parent=68 // pred_region
          _
        $region73: #{udop_patch_embeddings.1} parent=68 // pred_fallthru
          _
        %s338 = sand.u32 %s39, 1
        %s339 = sand.u32 %s39, 1
        %s340 = smul.addr %s339, 64
        %s341 = scalar_lea.vmem [#allocation3], %s340
        %p342 = pneg %p52
        %p343 = pneg %p49
        %p344 = pneg %p73
        %p345 = pneg %p70
        %p346 = pneg %p94
        %p347 = pneg %p91
        %p348 = pneg %p122
        %p349 = pneg %p119
        %s350 = sand.u32 %s109, 1
        %s351 = scalar_lea.sflag [#allocation5], %s350
        %s352 = sand.u32 %s109, 1
        %s353 = smul.addr %s352, 2
        %s354 = scalar_lea.vmem [#allocation4], %s353
        %v355 = vld [vmem:[%s334] sm:$0x3]
        %vm356 = vcmask 58368
        %357 = vst.msk [vmem:[#allocation2] sm:$0x3] %vm356, %v355
        %s358 = scalar_lea.vmem %s334, 2 [#allocation3]
        %v359 = vld [vmem:[%s358] sm:$0x3]
        %361 = vrot.lane.b32.xlu0 %v359, 8
        %v362 = vpop.permute.xlu0 %361
        %vm364 = vcmask 123968
        %365 = vst.msk [vmem:[#allocation2] sm:$0x3] %vm364, %v362
        %s366 = scalar_lea.vmem %s334, 4 [#allocation3]
        %v367 = vld [vmem:[%s366] sm:$0x3]
        %369 = vrot.lane.b32.xlu0 %v367, 16
        %v370 = vpop.permute.xlu0 %369
        %vm372 = vcmask 189568
        %373 = vst.msk [vmem:[#allocation2] sm:$0x3] %vm372, %v370
        %s374 = scalar_lea.vmem %s334, 6 [#allocation3]
        %v375 = vld [vmem:[%s374] sm:$0x3]
        %377 = vrot.lane.b32.xlu0 %v375, 24
        %v378 = vpop.permute.xlu0 %377
        %vm380 = vcmask 255168
        %381 = vst.msk [vmem:[#allocation2] sm:$0x3] %vm380, %v378
        %s382 = scalar_lea.vmem %s334, 8 [#allocation3]
        %v383 = vld [vmem:[%s382] sm:$0x3]
        %385 = vrot.lane.b32.xlu0 %v383, 32
        %v386 = vpop.permute.xlu0 %385
        %vm388 = vcmask 320768
        %389 = vst.msk [vmem:[#allocation2] sm:$0x3] %vm388, %v386
        %s390 = scalar_lea.vmem %s334, 10 [#allocation3]
        %v391 = vld [vmem:[%s390] sm:$0x3]
        %393 = vrot.lane.b32.xlu0 %v391, 40
        %v394 = vpop.permute.xlu0 %393
        %vm396 = vcmask 386368
        %397 = vst.msk [vmem:[#allocation2] sm:$0x3] %vm396, %v394
        %s398 = scalar_lea.vmem %s334, 12 [#allocation3]
        %v399 = vld [vmem:[%s398] sm:$0x3]
        %401 = vrot.lane.b32.xlu0 %v399, 48
        %v402 = vpop.permute.xlu0 %401
        %vm404 = vcmask 451968
        %405 = vst.msk [vmem:[#allocation2] sm:$0x3] %vm404, %v402
        %s406 = scalar_lea.vmem %s334, 14 [#allocation3]
        %v407 = vld [vmem:[%s406] sm:$0x3]
        %409 = vrot.lane.b32.xlu0 %v407, 56
        %v410 = vpop.permute.xlu0 %409
        %vm412 = vcmask 517568
        %413 = vst.msk [vmem:[#allocation2] sm:$0x3] %vm412, %v410
        %s414 = scalar_lea.vmem %s334, 16 [#allocation3]
        %v415 = vld [vmem:[%s414] sm:$0x3]
        %417 = vrot.lane.b32.xlu0 %v415, 64
        %v418 = vpop.permute.xlu0 %417
        %vm420 = vcmask 583168
        %421 = vst.msk [vmem:[#allocation2] sm:$0x3] %vm420, %v418
        %s422 = scalar_lea.vmem %s334, 18 [#allocation3]
        %v423 = vld [vmem:[%s422] sm:$0x3]
        %425 = vrot.lane.b32.xlu0 %v423, 72
        %v426 = vpop.permute.xlu0 %425
        %vm428 = vcmask 648768
        %429 = vst.msk [vmem:[#allocation2] sm:$0x3] %vm428, %v426
        %s430 = scalar_lea.vmem %s334, 20 [#allocation3]
        %v431 = vld [vmem:[%s430] sm:$0x3]
        %433 = vrot.lane.b32.xlu0 %v431, 80
        %v434 = vpop.permute.xlu0 %433
        %vm436 = vcmask 714368
        %437 = vst.msk [vmem:[#allocation2] sm:$0x3] %vm436, %v434
        %s438 = scalar_lea.vmem %s334, 22 [#allocation3]
        %v439 = vld [vmem:[%s438] sm:$0x3]
        %441 = vrot.lane.b32.xlu0 %v439, 88
        %v442 = vpop.permute.xlu0 %441
        %vm444 = vcmask 779968
        %445 = vst.msk [vmem:[#allocation2] sm:$0x3] %vm444, %v442
        %s446 = scalar_lea.vmem %s334, 24 [#allocation3]
        %v447 = vld [vmem:[%s446] sm:$0x3]
        %449 = vrot.lane.b32.xlu0 %v447, 96
        %v450 = vpop.permute.xlu0 %449
        %vm452 = vcmask 845568
        %453 = vst.msk [vmem:[#allocation2] sm:$0x3] %vm452, %v450
        %s454 = scalar_lea.vmem %s334, 26 [#allocation3]
        %v455 = vld [vmem:[%s454] sm:$0x3]
        %457 = vrot.lane.b32.xlu0 %v455, 104
        %v458 = vpop.permute.xlu0 %457
        %vm460 = vcmask 911168
        %461 = vst.msk [vmem:[#allocation2] sm:$0x3] %vm460, %v458
        %s462 = scalar_lea.vmem %s334, 28 [#allocation3]
        %v463 = vld [vmem:[%s462] sm:$0x3]
        %465 = vrot.lane.b32.xlu0 %v463, 112
        %v466 = vpop.permute.xlu0 %465
        %vm468 = vcmask 976768
        %469 = vst.msk [vmem:[#allocation2] sm:$0x3] %vm468, %v466
        %s470 = scalar_lea.vmem %s334, 30 [#allocation3]
        %v471 = vld [vmem:[%s470] sm:$0x3]
        %473 = vrot.lane.b32.xlu0 %v471, 120
        %v474 = vpop.permute.xlu0 %473
        %vm476 = vcmask 1042368
        %477 = vst.msk [vmem:[#allocation2] sm:$0x3] %vm476, %v474
        %s478 = scalar_lea.vmem %s334, 32 [#allocation3]
        %v479 = vld [vmem:[%s478] sm:$0x3]
        %480 = vst.msk [vmem:[#allocation2 + $0x2] sm:$0x3] %vm356, %v479
        %s481 = scalar_lea.vmem %s334, 34 [#allocation3]
        %v482 = vld [vmem:[%s481] sm:$0x3]
        %484 = vrot.lane.b32.xlu0 %v482, 8
        %v485 = vpop.permute.xlu0 %484
        %487 = vst.msk [vmem:[#allocation2 + $0x2] sm:$0x3] %vm364, %v485
        %s488 = scalar_lea.vmem %s334, 36 [#allocation3]
        %v489 = vld [vmem:[%s488] sm:$0x3]
        %491 = vrot.lane.b32.xlu0 %v489, 16
        %v492 = vpop.permute.xlu0 %491
        %494 = vst.msk [vmem:[#allocation2 + $0x2] sm:$0x3] %vm372, %v492
        %s495 = scalar_lea.vmem %s334, 38 [#allocation3]
        %v496 = vld [vmem:[%s495] sm:$0x3]
        %498 = vrot.lane.b32.xlu0 %v496, 24
        %v499 = vpop.permute.xlu0 %498
        %501 = vst.msk [vmem:[#allocation2 + $0x2] sm:$0x3] %vm380, %v499
        %s502 = scalar_lea.vmem %s334, 40 [#allocation3]
        %v503 = vld [vmem:[%s502] sm:$0x3]
        %505 = vrot.lane.b32.xlu0 %v503, 32
        %v506 = vpop.permute.xlu0 %505
        %508 = vst.msk [vmem:[#allocation2 + $0x2] sm:$0x3] %vm388, %v506
        %s509 = scalar_lea.vmem %s334, 42 [#allocation3]
        %v510 = vld [vmem:[%s509] sm:$0x3]
        %512 = vrot.lane.b32.xlu0 %v510, 40
        %v513 = vpop.permute.xlu0 %512
        %515 = vst.msk [vmem:[#allocation2 + $0x2] sm:$0x3] %vm396, %v513
        %s516 = scalar_lea.vmem %s334, 44 [#allocation3]
        %v517 = vld [vmem:[%s516] sm:$0x3]
        %519 = vrot.lane.b32.xlu0 %v517, 48
        %v520 = vpop.permute.xlu0 %519
        %522 = vst.msk [vmem:[#allocation2 + $0x2] sm:$0x3] %vm404, %v520
        %s523 = scalar_lea.vmem %s334, 46 [#allocation3]
        %v524 = vld [vmem:[%s523] sm:$0x3]
        %526 = vrot.lane.b32.xlu0 %v524, 56
        %v527 = vpop.permute.xlu0 %526
        %529 = vst.msk [vmem:[#allocation2 + $0x2] sm:$0x3] %vm412, %v527
        %s530 = scalar_lea.vmem %s334, 48 [#allocation3]
        %v531 = vld [vmem:[%s530] sm:$0x3]
        %533 = vrot.lane.b32.xlu0 %v531, 64
        %v534 = vpop.permute.xlu0 %533
        %536 = vst.msk [vmem:[#allocation2 + $0x2] sm:$0x3] %vm420, %v534
        %s537 = scalar_lea.vmem %s334, 50 [#allocation3]
        %v538 = vld [vmem:[%s537] sm:$0x3]
        %540 = vrot.lane.b32.xlu0 %v538, 72
        %v541 = vpop.permute.xlu0 %540
        %543 = vst.msk [vmem:[#allocation2 + $0x2] sm:$0x3] %vm428, %v541
        %s544 = scalar_lea.vmem %s334, 52 [#allocation3]
        %v545 = vld [vmem:[%s544] sm:$0x3]
        %547 = vrot.lane.b32.xlu0 %v545, 80
        %v548 = vpop.permute.xlu0 %547
        %550 = vst.msk [vmem:[#allocation2 + $0x2] sm:$0x3] %vm436, %v548
        %s551 = scalar_lea.vmem %s334, 54 [#allocation3]
        %v552 = vld [vmem:[%s551] sm:$0x3]
        %554 = vrot.lane.b32.xlu0 %v552, 88
        %v555 = vpop.permute.xlu0 %554
        %557 = vst.msk [vmem:[#allocation2 + $0x2] sm:$0x3] %vm444, %v555
        %s558 = scalar_lea.vmem %s334, 56 [#allocation3]
        %v559 = vld [vmem:[%s558] sm:$0x3]
        %561 = vrot.lane.b32.xlu0 %v559, 96
        %v562 = vpop.permute.xlu0 %561
        %564 = vst.msk [vmem:[#allocation2 + $0x2] sm:$0x3] %vm452, %v562
        %s565 = scalar_lea.vmem %s334, 58 [#allocation3]
        %v566 = vld [vmem:[%s565] sm:$0x3]
        %568 = vrot.lane.b32.xlu0 %v566, 104
        %v569 = vpop.permute.xlu0 %568
        %571 = vst.msk [vmem:[#allocation2 + $0x2] sm:$0x3] %vm460, %v569
        %s572 = scalar_lea.vmem %s334, 60 [#allocation3]
        %v573 = vld [vmem:[%s572] sm:$0x3]
        %575 = vrot.lane.b32.xlu0 %v573, 112
        %v576 = vpop.permute.xlu0 %575
        %578 = vst.msk [vmem:[#allocation2 + $0x2] sm:$0x3] %vm468, %v576
        %s579 = scalar_lea.vmem %s334, 62 [#allocation3]
        %v580 = vld [vmem:[%s579] sm:$0x3]
        %582 = vrot.lane.b32.xlu0 %v580, 120
        %v583 = vpop.permute.xlu0 %582
        %585 = vst.msk [vmem:[#allocation2 + $0x2] sm:$0x3] %vm476, %v583
        %v586 = vld [vmem:[#allocation2] sm:$0xf]
        %v587 = vld [vmem:[%s1] sm:$0xff]
        %v588 = vld [vmem:[%s1 + $0x8] sm:$0xff]
        %v589 = vld [vmem:[%s1 + $0x10] sm:$0xff]
        %v590 = vld [vmem:[%s1 + $0x18] sm:$0xff]
        %v591 = vld [vmem:[%s1 + $0x20] sm:$0xff]
        %v592 = vld [vmem:[%s1 + $0x28] sm:$0xff]
        %v593 = vld [vmem:[%s1 + $0x30] sm:$0xff]
        %v594 = vld [vmem:[%s1 + $0x38] sm:$0xff]
        %v595 = vld [vmem:[%s2] sm:$0x1]
        %v597 = vperm.slane %v595, 0
        %600 = vst [vmem:[#allocation1] ss:$4 sm:$0xff] %v586
        %v601 = vld.sshfl [vmem:[#allocation1] sm:$0xff pattern:$0x73625140]
        %v602 = vld.sshfl [vmem:[#allocation1 + $0x8] sm:$0xff pattern:$0x73625140]
        %605 = vmatpush.xpose.msra.mxu0 0.0
        %606 = vmatpush.xpose.msra.mxu0 0.0
        %607 = vmatpush.xpose.msra.mxu0 0.0
        %608 = vmatpush.xpose.msra.mxu0 0.0
        %609 = vmatpush.xpose.msra.mxu0 0.0
        %610 = vmatpush.xpose.msra.mxu0 0.0
        %611 = vmatpush.xpose.msra.mxu0 0.0
        %612 = vmatpush.xpose.msra.mxu0 0.0
        %613 = vmatpush.xpose.msra.mxu0 0.0
        %614 = vmatpush.xpose.msra.mxu0 0.0
        %615 = vmatpush.xpose.msra.mxu0 0.0
        %616 = vmatpush.xpose.msra.mxu0 0.0
        %617 = vmatpush.xpose.msra.mxu0 %v593
        %618 = vmatpush.xpose.msra.mxu0 %v591
        %619 = vmatpush.xpose.msra.mxu0 %v589
        %620 = vmatpush.xpose.msra.mxu0 %v587
        %621 = vmatmul.f32.gmra.mxu0 %v601
        %v622 = vpop.f32.mrf.mxu0
        %v623 = vadd.f32 %v597, %v622
        %624 = vdwg.mxu0
        %625 = vmatpush.xpose.msra.mxu0 0.0
        %626 = vmatpush.xpose.msra.mxu0 0.0
        %627 = vmatpush.xpose.msra.mxu0 0.0
        %628 = vmatpush.xpose.msra.mxu0 0.0
        %629 = vmatpush.xpose.msra.mxu0 0.0
        %630 = vmatpush.xpose.msra.mxu0 0.0
        %631 = vmatpush.xpose.msra.mxu0 0.0
        %632 = vmatpush.xpose.msra.mxu0 0.0
        %633 = vmatpush.xpose.msra.mxu0 0.0
        %634 = vmatpush.xpose.msra.mxu0 0.0
        %635 = vmatpush.xpose.msra.mxu0 0.0
        %636 = vmatpush.xpose.msra.mxu0 0.0
        %637 = vmatpush.xpose.msra.mxu0 %v594
        %638 = vmatpush.xpose.msra.mxu0 %v592
        %639 = vmatpush.xpose.msra.mxu0 %v590
        %640 = vmatpush.xpose.msra.mxu0 %v588
        %641 = vmatmul.f32.gmra.mxu0 %v602
        %v642 = vpop.f32.mrf.mxu0
        %v643 = vadd.f32 %v623, %v642
        %644 = vdwg.mxu0
        %vm645 = vcmask 254976
        %646 = vst.msk [vmem:[%s354] sm:$0x3] %vm645, %v643
        %s647 = sand.u32 %s109, 1
        %s648 = scalar_lea.sflag [#allocation5], %s647
        %s649 = sand.u32 %s109, 1
        %s650 = smul.addr %s649, 2
        %s651 = scalar_lea.vmem [#allocation4], %s650
        // Predicated region
        $region74: #{udop_patch_embeddings.1} parent=68 // pred_check
          %p652 = pneg %p119
        $region75: #{udop_patch_embeddings.1} parent=68 // pred_check_branch
          %654 = sbr.rel (%p652) target = $region77
        $region76: #{udop_patch_embeddings.1} parent=68 // pred_region
          %656 = vsyncadd %s648, 0
          %s657 = smul.addr %s21, 2
          %s658 = sadd.s32 %s22, %s657
          %s659 = smul.addr %s658, 2
          %s660 = scalar_lea.hbm %s3, %s659
          %s662 = sshll.u32 %s651, 4
          %s663 = int_to_ptr.vmem [resolvable:$true] %s662
          %s664 = sshll.u32 %s660, 4
          %s665 = int_to_ptr.hbm [resolvable:$true] %s664
          %667 = dma.vmem_to_hbm [thread:$0]  %s663, 32, %s665, %s648
        $region77: #{udop_patch_embeddings.1} parent=68 // pred_fallthru
          _
      $region69: #{udop_patch_embeddings.1} parent=5 // pred_fallthru
        _
      %p668 = scmp.le.s32.totalorder 2, %s12
      // Predicated region
      $region78: #{udop_patch_embeddings.1} parent=5 // pred_check
        %p669 = pneg %p668
      $region79: #{udop_patch_embeddings.1} parent=5 // pred_check_branch
        %671 = sbr.rel (%p669) target = $region81
      $region80: #{udop_patch_embeddings.1} parent=5 // pred_region
        %s672 = ssub.s32 %s12, 2
        // Predicated region
        $region82: #{udop_patch_embeddings.1} parent=80 // pred_check
          %p673 = pneg %p125
        $region83: #{udop_patch_embeddings.1} parent=80 // pred_check_branch
          %675 = sbr.rel (%p673) target = $region85
        $region84: #{udop_patch_embeddings.1} parent=80 // pred_region
          %s676 = sand.u32 %s110, 1
          %s677 = scalar_lea.sflag [#allocation5], %s676
          %s678 = sand.u32 %s110, 1
          %s679 = smul.addr %s678, 2
          %s680 = scalar_lea.vmem [#allocation4], %s679
          %682 = dma.done %s677, 32
        $region85: #{udop_patch_embeddings.1} parent=80 // pred_fallthru
          _
      $region81: #{udop_patch_embeddings.1} parent=5 // pred_fallthru
        _
    $region6: #{udop_patch_embeddings.1} parent=1 // loop_footer
      %s16 = sadd.s32 1, %s12
    $region7: #{udop_patch_embeddings.1} parent=1 // loop_footer_branch
      %11 = sbr.rel target = $region3
    $region8: #{udop_patch_embeddings.1} parent=1 // loop_exit
      _
    %683 = vsyncpa [#allocation5], 1
    %s684 = scalar_lea.sflag [#allocation5], 1
    %685 = vsyncpa %s684, 1

</llo_original>
